<compile_context>
chip_gen: v5e
topology: v5e:2x2
jax: 0.10.0
libtpu: 0.0.40
codegen_flags: <defaults>
</compile_context>

<pallas_src>
import jax
import jax.numpy as jnp
import numpy as np
from jax.experimental import pallas as pl
from jax.experimental.pallas import tpu as pltpu


def _make_cat_kernel(num_layers: int, d: int):
    """Kernel over one row tile for all layers at once.

    refs layout: (f1_0, f2_0, f1_1, f2_1, ..., out_0, out_1, ...)
      f*_i : (TILE_R, D)   VMEM
      out_i: (TILE_R, 2*D) VMEM  -- [f1_i | f2_i] concatenated on the lane axis.
    """

    def kernel(*refs):
        in_refs = refs[: 2 * num_layers]
        out_refs = refs[2 * num_layers:]
        for i in range(num_layers):
            f1_ref = in_refs[2 * i]
            f2_ref = in_refs[2 * i + 1]
            o_ref = out_refs[i]
            # Two lane-aligned (D % 128 == 0) dense stores == concat on lanes.
            o_ref[:, :d] = f1_ref[...]
            o_ref[:, d:] = f2_ref[...]

    return kernel


def _row_tile(rows: int, d: int, itemsize: int, num_layers: int) -> int:
    """Largest sublane-aligned row tile that keeps double-buffered VMEM modest."""
    # Sublane packing multiple: f32 -> 8, bf16 -> 16, int8/fp8 -> 32.
    sub = max(8, 32 // max(1, itemsize))
    # Per grid step, double-buffered residency per layer is roughly
    #   2 bufs * (2 input tiles (TILE*D) + 1 output tile (TILE*2D)) = 8*TILE*D bytes*itemsize.
    budget_bytes = 24 * 1024 * 1024  # conservative: fits v7x (64 MiB phys) with headroom
    max_rows = budget_bytes // (8 * d * itemsize * num_layers)
    tile = min(2048, max(sub, max_rows))
    tile -= tile % sub
    tile = max(tile, sub)
    if tile >= rows:
        # Everything fits in one tile; split in two so v7x megacore gets both TCs.
        if rows >= 2 * sub and rows % (2 * sub) == 0:
            return rows // 2
        return rows  # single full-extent block (exempt from the sublane multiple rule)
    return tile


def _cat_pairs_fused(f1s, f2s):
    """One pallas_call concatenating every (f1, f2) pair along the feature dim."""
    num_layers = len(f1s)
    lead = f1s[0].shape[:-1]
    d = f1s[0].shape[-1]
    dtype = f1s[0].dtype
    rows = int(np.prod(lead)) if lead else 1
    itemsize = jnp.dtype(dtype).itemsize

    if d % 128 != 0 or rows == 0:
        # TODO(synk): non-lane-aligned D -> masked stores; plain XLA concat is roofline here.
        return [jnp.concatenate([a, b], axis=-1) for a, b in zip(f1s, f2s)]

    tile = _row_tile(rows, d, itemsize, num_layers)
    grid = (pl.cdiv(rows, tile),)

    flat_inputs = []
    for a, b in zip(f1s, f2s):
        flat_inputs.append(a.reshape(rows, d))
        flat_inputs.append(b.reshape(rows, d))

    in_specs = [pl.BlockSpec((tile, d), lambda r: (r, 0)) for _ in range(2 * num_layers)]
    out_specs = [pl.BlockSpec((tile, 2 * d), lambda r: (r, 0)) for _ in range(num_layers)]
    out_shape = tuple(
        jax.ShapeDtypeStruct((rows, 2 * d), dtype) for _ in range(num_layers)
    )

    outs = pl.pallas_call(
        _make_cat_kernel(num_layers, d),
        out_shape=out_shape,
        grid=grid,
        in_specs=in_specs,
        out_specs=out_specs,
        compiler_params=pltpu.CompilerParams(
            dimension_semantics=("parallel",),
            vmem_limit_bytes=48 * 1024 * 1024,
        ),
    )(*flat_inputs)

    if not isinstance(outs, (list, tuple)):
        outs = (outs,)
    return [o.reshape(*lead, 2 * d) for o in outs]


def cat_in_dim_forward(features1, features2):
    """[cat([f1, f2], dim=-1) for each pair] -- fused into one kernel launch when possible."""
    features1 = list(features1)
    features2 = list(features2)
    assert len(features1) == len(features2)
    if not features1:
        return []

    same_pairwise = all(
        f1.shape == f2.shape and f1.dtype == f2.dtype
        for f1, f2 in zip(features1, features2)
    )
    all_same = (
        same_pairwise
        and len({f.shape for f in features1}) == 1
        and len({str(f.dtype) for f in features1}) == 1
    )

    if all_same:
        return _cat_pairs_fused(features1, features2)
    # Fallback: layers with heterogeneous shapes -> one (still row-tiled) call each.
    outs = []
    for f1, f2 in zip(features1, features2):
        assert f1.shape == f2.shape and f1.dtype == f2.dtype
        outs.append(_cat_pairs_fused([f1], [f2])[0])
    return outs


class CatInDim:
    """Mirror of cat_in_dim: no parameters, only metadata + the concat-on-feature op."""

    def __init__(self, output_dim: int, downsample_rate: int):
        self.upstream_dim = 2 * output_dim
        self.downsample_rate = downsample_rate
        self.trainable = False

    def __call__(self, features1, features2):
        return cat_in_dim_forward(features1, features2)


if __name__ == "__main__":
    key = jax.random.PRNGKey(0)
    B, T, D = 2, 8, 128          # small shapes; D lane-aligned
    n_layers = 2                 # forward consumes lists of feature tensors

    keys = jax.random.split(key, 2 * n_layers)
    features1 = [
        jax.random.normal(keys[i], (B, T, D), dtype=jnp.float32)
        for i in range(n_layers)
    ]
    features2 = [
        jax.random.normal(keys[n_layers + i], (B, T, D), dtype=jnp.float32)
        for i in range(n_layers)
    ]

    fusioner = CatInDim(output_dim=D, downsample_rate=320)
    outs = fusioner(features1, features2)
    outs = [jax.block_until_ready(o) for o in outs]

    # Verify against the pure-JAX reference of the torch semantics.
    for o, f1, f2 in zip(outs, features1, features2):
        ref = jnp.concatenate([f1, f2], axis=-1)
        assert o.shape == (B, T, 2 * D), o.shape
        np.testing.assert_array_equal(np.asarray(o), np.asarray(ref))
        np.testing.assert_array_equal(np.asarray(o[..., :D]), np.asarray(f1))
        np.testing.assert_array_equal(np.asarray(o[..., D:]), np.asarray(f2))

    print("KERNEL_OK")
</pallas_src>

<mosaic_0001>
module attributes {stable_mosaic.version = 11 : i64} {
  func.func @kernel(%arg0: i32, %arg1: memref<8x128xf32, #tpu.memory_space<vmem>>, %arg2: memref<8x128xf32, #tpu.memory_space<vmem>>, %arg3: memref<8x128xf32, #tpu.memory_space<vmem>>, %arg4: memref<8x128xf32, #tpu.memory_space<vmem>>, %arg5: memref<8x256xf32, #tpu.memory_space<vmem>>, %arg6: memref<8x256xf32, #tpu.memory_space<vmem>>) attributes {dimension_semantics = [#tpu.dimension_semantics<parallel>], iteration_bounds = array<i64: 2>, scalar_prefetch = 0 : i64, scratch_operands = 0 : i64, tpu.core_type = #tpu.core_type<tc>, window_params = [{transform_indices = @transform_0, window_bounds = array<i64: 8, 128>}, {transform_indices = @transform_1, window_bounds = array<i64: 8, 128>}, {transform_indices = @transform_2, window_bounds = array<i64: 8, 128>}, {transform_indices = @transform_3, window_bounds = array<i64: 8, 128>}, {transform_indices = @transform_4, window_bounds = array<i64: 8, 256>}, {transform_indices = @transform_5, window_bounds = array<i64: 8, 256>}]} {
    %c0 = arith.constant 0 : index
    %c0_0 = arith.constant 0 : index
    %0 = vector.load %arg1[%c0, %c0_0] : memref<8x128xf32, #tpu.memory_space<vmem>>, vector<8x128xf32>
    %c0_1 = arith.constant 0 : index
    %c0_2 = arith.constant 0 : index
    %1 = vector.load %arg5[%c0_1, %c0_2] : memref<8x256xf32, #tpu.memory_space<vmem>>, vector<8x128xf32>
    tpu.vector_store %arg5[%c0_1, %c0_2], %0 {strides = array<i32>} : memref<8x256xf32, #tpu.memory_space<vmem>>, vector<8x128xf32>,
    %c0_3 = arith.constant 0 : index
    %c0_4 = arith.constant 0 : index
    %2 = vector.load %arg2[%c0_3, %c0_4] : memref<8x128xf32, #tpu.memory_space<vmem>>, vector<8x128xf32>
    %c0_5 = arith.constant 0 : index
    %c128 = arith.constant 128 : index
    %3 = vector.load %arg5[%c0_5, %c128] : memref<8x256xf32, #tpu.memory_space<vmem>>, vector<8x128xf32>
    tpu.vector_store %arg5[%c0_5, %c128], %2 {strides = array<i32>} : memref<8x256xf32, #tpu.memory_space<vmem>>, vector<8x128xf32>,
    %c0_6 = arith.constant 0 : index
    %c0_7 = arith.constant 0 : index
    %4 = vector.load %arg3[%c0_6, %c0_7] : memref<8x128xf32, #tpu.memory_space<vmem>>, vector<8x128xf32>
    %c0_8 = arith.constant 0 : index
    %c0_9 = arith.constant 0 : index
    %5 = vector.load %arg6[%c0_8, %c0_9] : memref<8x256xf32, #tpu.memory_space<vmem>>, vector<8x128xf32>
    tpu.vector_store %arg6[%c0_8, %c0_9], %4 {strides = array<i32>} : memref<8x256xf32, #tpu.memory_space<vmem>>, vector<8x128xf32>,
    %c0_10 = arith.constant 0 : index
    %c0_11 = arith.constant 0 : index
    %6 = vector.load %arg4[%c0_10, %c0_11] : memref<8x128xf32, #tpu.memory_space<vmem>>, vector<8x128xf32>
    %c0_12 = arith.constant 0 : index
    %c128_13 = arith.constant 128 : index
    %7 = vector.load %arg6[%c0_12, %c128_13] : memref<8x256xf32, #tpu.memory_space<vmem>>, vector<8x128xf32>
    tpu.vector_store %arg6[%c0_12, %c128_13], %6 {strides = array<i32>} : memref<8x256xf32, #tpu.memory_space<vmem>>, vector<8x128xf32>,
    return
  }
  func.func @transform_0(%arg0: i32) -> (i32, i32) {
    %c0_i32 = arith.constant 0 : i32
    %c0_i32_0 = arith.constant 0 : i32
    return %arg0, %c0_i32 : i32, i32
  }
  func.func @transform_1(%arg0: i32) -> (i32, i32) {
    %c0_i32 = arith.constant 0 : i32
    %c0_i32_0 = arith.constant 0 : i32
    return %arg0, %c0_i32 : i32, i32
  }
  func.func @transform_2(%arg0: i32) -> (i32, i32) {
    %c0_i32 = arith.constant 0 : i32
    %c0_i32_0 = arith.constant 0 : i32
    return %arg0, %c0_i32 : i32, i32
  }
  func.func @transform_3(%arg0: i32) -> (i32, i32) {
    %c0_i32 = arith.constant 0 : i32
    %c0_i32_0 = arith.constant 0 : i32
    return %arg0, %c0_i32 : i32, i32
  }
  func.func @transform_4(%arg0: i32) -> (i32, i32) {
    %c0_i32 = arith.constant 0 : i32
    %c0_i32_0 = arith.constant 0 : i32
    return %arg0, %c0_i32 : i32, i32
  }
  func.func @transform_5(%arg0: i32) -> (i32, i32) {
    %c0_i32 = arith.constant 0 : i32
    %c0_i32_0 = arith.constant 0 : i32
    return %arg0, %c0_i32 : i32, i32
  }
}

</mosaic_0001>

<llo_original>
// kernel: tpu_custom_call.1
$region0: #{tpu_custom_call.1}
  #allocation0 [shape = 'u32[]', space=smem, size = 0x4, offset = 0x4, fixed_abs, tag = 'smem constant byte address 0x4 - core index']
  #allocation1 [shape = 'u32[72,128]{1,0:T(1,128)}', space=vmem, size = 0x9000, scoped, tag = 'internal scratch']
  %s0 = inlined_call_operand.hbm [shape: f32[16,128], index: 0, kind: input, shape index: {}]
  %s1 = inlined_call_operand.hbm [shape: f32[16,128], index: 1, kind: input, shape index: {}]
  %s2 = inlined_call_operand.hbm [shape: f32[16,128], index: 2, kind: input, shape index: {}]
  %s3 = inlined_call_operand.hbm [shape: f32[16,128], index: 3, kind: input, shape index: {}]
  %s4 = inlined_call_operand.hbm [shape: f32[16,256], index: 4, kind: output, shape index: {0}]
  %s5 = inlined_call_operand.hbm [shape: f32[16,256], index: 5, kind: output, shape index: {1}]
  %6 = xla_tuple %s4, %s5
  %s7 = sld [smem:[#allocation0]]
  $region73: #{tpu_custom_call.1} parent=0
    _
  %s9 = ssub.s32 1, %s7
  %s10 = scalar_select 0, %s9, %s7
  $region1: #{tpu_custom_call.1} parent=0
    #allocation2 [shape = 'u8[8192]{0}', space=vmem, size = 0x2000, scoped, tag = 'input window, operand 0']
    #allocation3 [shape = 's32[2]{0}', space=sflag, size = 0x8, scoped, tag = 'scoped memory for tpu_custom_call.1']
    #allocation4 [shape = 's32[2]{0}', space=sflag, size = 0x8, scoped, tag = 'scoped memory for tpu_custom_call.1']
    #allocation5 [shape = 'u8[8192]{0}', space=vmem, size = 0x2000, scoped, tag = 'input window, operand 1']
    #allocation6 [shape = 's32[2]{0}', space=sflag, size = 0x8, scoped, tag = 'scoped memory for tpu_custom_call.1']
    #allocation7 [shape = 'u8[8192]{0}', space=vmem, size = 0x2000, scoped, tag = 'input window, operand 2']
    #allocation8 [shape = 'u8[8192]{0}', space=vmem, size = 0x2000, scoped, tag = 'input window, operand 3']
    #allocation9 [shape = 's32[2]{0}', space=sflag, size = 0x8, scoped, tag = 'scoped memory for tpu_custom_call.1']
    #allocation10 [shape = 'u8[16384]{0}', space=vmem, size = 0x4000, scoped, tag = 'output window, operand 0']
    #allocation11 [shape = 'u8[16384]{0}', space=vmem, size = 0x4000, scoped, tag = 'output window, operand 1']
    #allocation12 [shape = 's32[2]{0}', space=sflag, size = 0x8, scoped, tag = 'scoped memory for tpu_custom_call.1']
    %11 = vsyncpa [#allocation3], 0
    %s12 = scalar_lea.sflag [#allocation3], 1
    %13 = vsyncpa %s12, 0
    %14 = vsyncpa [#allocation6], 0
    %s15 = scalar_lea.sflag [#allocation6], 1
    %16 = vsyncpa %s15, 0
    %17 = vsyncpa [#allocation9], 0
    %s18 = scalar_lea.sflag [#allocation9], 1
    %19 = vsyncpa %s18, 0
    %20 = vsyncpa [#allocation4], 0
    %s21 = scalar_lea.sflag [#allocation4], 1
    %22 = vsyncpa %s21, 0
    %23 = vsyncpa [#allocation12], 0
    %s24 = scalar_lea.sflag [#allocation12], 1
    %25 = vsyncpa %s24, 0
    loop: start=0, step=1, limit=4
    $region2: #{tpu_custom_call.1} parent=1 // loop_pre_header
      _
    $region3: #{tpu_custom_call.1} parent=1 // loop_header
      %s27 = sphi 0, %s31
      %p28 = scmp.ge.s32.totalorder %s27, 4
      %s37 = sphi 0, %s39
      %s40 = sphi 0, %s37
      %s41 = sphi 0, %s40
      %s57 = sphi 0, %s41
      %s63 = sphi 0, %s65
      %s66 = sphi 0, %s63
      %s67 = sphi 0, %s66
      %s83 = sphi 0, %s67
      %s89 = sphi 0, %s91
      %s92 = sphi 0, %s89
      %s93 = sphi 0, %s92
      %s109 = sphi 0, %s93
      %s115 = sphi 0, %s117
      %s118 = sphi 0, %s115
      %s119 = sphi 0, %s118
      %s135 = sphi 0, %s119
      %s141 = sphi 0, %s143
      %s144 = sphi 0, %s141
      %s145 = sphi 0, %s144
      %s161 = sphi 0, %s145
      %s167 = sphi 0, %s169
      %s170 = sphi 0, %s167
      %s171 = sphi 0, %s170
      %s187 = sphi 0, %s171
    $region4: #{tpu_custom_call.1} parent=1 // loop_header_branch
      %30 = sbr.rel (%p28) target = $region8
    $region5: #{tpu_custom_call.1} parent=1 // loop_body
      %s32 = ssub.s32 %s27, 1
      %s33 = ssub.s32 %s27, 2
      %s34 = sadd.s32 %s27, 1
      %s35 = ssub.s32 %s27, %s34
      %p36 = scmp.eq.s32.totalorder %s35, 0
      %s38 = sadd.s32 %s37, 1
      %s39 = scalar_select %p36, %s37, %s38
      %p42 = pneg %p36
      %p43 = scmp.eq.s32.totalorder %s27, 1
      %p44 = por %p42, %p43
      %p45 = scmp.ne.s32.totalorder %s37, %s40
      %p46 = scmp.eq.s32.totalorder %s27, 0
      %p47 = por %p45, %p46
      %p48 = scmp.ne.s32.totalorder %s37, %s40
      %p49 = scmp.eq.s32.totalorder %s32, 1
      %p50 = por %p48, %p49
      %p51 = scmp.ne.s32.totalorder %s40, %s41
      %p52 = scmp.eq.s32.totalorder %s32, 0
      %p53 = por %p51, %p52
      %p54 = scmp.ne.s32.totalorder %s40, %s41
      %p55 = scmp.eq.s32.totalorder %s33, 1
      %p56 = por %p54, %p55
      %p58 = scmp.ne.s32.totalorder %s41, %s57
      %p59 = scmp.eq.s32.totalorder %s33, 0
      %p60 = por %p58, %p59
      %s61 = ssub.s32 %s27, %s34
      %p62 = scmp.eq.s32.totalorder %s61, 0
      %s64 = sadd.s32 %s63, 1
      %s65 = scalar_select %p62, %s63, %s64
      %p68 = pneg %p62
      %p69 = scmp.eq.s32.totalorder %s27, 1
      %p70 = por %p68, %p69
      %p71 = scmp.ne.s32.totalorder %s63, %s66
      %p72 = scmp.eq.s32.totalorder %s27, 0
      %p73 = por %p71, %p72
      %p74 = scmp.ne.s32.totalorder %s63, %s66
      %p75 = scmp.eq.s32.totalorder %s32, 1
      %p76 = por %p74, %p75
      %p77 = scmp.ne.s32.totalorder %s66, %s67
      %p78 = scmp.eq.s32.totalorder %s32, 0
      %p79 = por %p77, %p78
      %p80 = scmp.ne.s32.totalorder %s66, %s67
      %p81 = scmp.eq.s32.totalorder %s33, 1
      %p82 = por %p80, %p81
      %p84 = scmp.ne.s32.totalorder %s67, %s83
      %p85 = scmp.eq.s32.totalorder %s33, 0
      %p86 = por %p84, %p85
      %s87 = ssub.s32 %s27, %s34
      %p88 = scmp.eq.s32.totalorder %s87, 0
      %s90 = sadd.s32 %s89, 1
      %s91 = scalar_select %p88, %s89, %s90
      %p94 = pneg %p88
      %p95 = scmp.eq.s32.totalorder %s27, 1
      %p96 = por %p94, %p95
      %p97 = scmp.ne.s32.totalorder %s89, %s92
      %p98 = scmp.eq.s32.totalorder %s27, 0
      %p99 = por %p97, %p98
      %p100 = scmp.ne.s32.totalorder %s89, %s92
      %p101 = scmp.eq.s32.totalorder %s32, 1
      %p102 = por %p100, %p101
      %p103 = scmp.ne.s32.totalorder %s92, %s93
      %p104 = scmp.eq.s32.totalorder %s32, 0
      %p105 = por %p103, %p104
      %p106 = scmp.ne.s32.totalorder %s92, %s93
      %p107 = scmp.eq.s32.totalorder %s33, 1
      %p108 = por %p106, %p107
      %p110 = scmp.ne.s32.totalorder %s93, %s109
      %p111 = scmp.eq.s32.totalorder %s33, 0
      %p112 = por %p110, %p111
      %s113 = ssub.s32 %s27, %s34
      %p114 = scmp.eq.s32.totalorder %s113, 0
      %s116 = sadd.s32 %s115, 1
      %s117 = scalar_select %p114, %s115, %s116
      %p120 = pneg %p114
      %p121 = scmp.eq.s32.totalorder %s27, 1
      %p122 = por %p120, %p121
      %p123 = scmp.ne.s32.totalorder %s115, %s118
      %p124 = scmp.eq.s32.totalorder %s27, 0
      %p125 = por %p123, %p124
      %p126 = scmp.ne.s32.totalorder %s115, %s118
      %p127 = scmp.eq.s32.totalorder %s32, 1
      %p128 = por %p126, %p127
      %p129 = scmp.ne.s32.totalorder %s118, %s119
      %p130 = scmp.eq.s32.totalorder %s32, 0
      %p131 = por %p129, %p130
      %p132 = scmp.ne.s32.totalorder %s118, %s119
      %p133 = scmp.eq.s32.totalorder %s33, 1
      %p134 = por %p132, %p133
      %p136 = scmp.ne.s32.totalorder %s119, %s135
      %p137 = scmp.eq.s32.totalorder %s33, 0
      %p138 = por %p136, %p137
      %s139 = ssub.s32 %s27, %s34
      %p140 = scmp.eq.s32.totalorder %s139, 0
      %s142 = sadd.s32 %s141, 1
      %s143 = scalar_select %p140, %s141, %s142
      %p146 = pneg %p140
      %p147 = scmp.eq.s32.totalorder %s27, 1
      %p148 = por %p146, %p147
      %p149 = scmp.ne.s32.totalorder %s141, %s144
      %p150 = scmp.eq.s32.totalorder %s27, 0
      %p151 = por %p149, %p150
      %p152 = scmp.ne.s32.totalorder %s141, %s144
      %p153 = scmp.eq.s32.totalorder %s32, 1
      %p154 = por %p152, %p153
      %p155 = scmp.ne.s32.totalorder %s144, %s145
      %p156 = scmp.eq.s32.totalorder %s32, 0
      %p157 = por %p155, %p156
      %p158 = scmp.ne.s32.totalorder %s144, %s145
      %p159 = scmp.eq.s32.totalorder %s33, 1
      %p160 = por %p158, %p159
      %p162 = scmp.ne.s32.totalorder %s145, %s161
      %p163 = scmp.eq.s32.totalorder %s33, 0
      %p164 = por %p162, %p163
      %s165 = ssub.s32 %s27, %s34
      %p166 = scmp.eq.s32.totalorder %s165, 0
      %s168 = sadd.s32 %s167, 1
      %s169 = scalar_select %p166, %s167, %s168
      %p172 = pneg %p166
      %p173 = scmp.eq.s32.totalorder %s27, 1
      %p174 = por %p172, %p173
      %p175 = scmp.ne.s32.totalorder %s167, %s170
      %p176 = scmp.eq.s32.totalorder %s27, 0
      %p177 = por %p175, %p176
      %p178 = scmp.ne.s32.totalorder %s167, %s170
      %p179 = scmp.eq.s32.totalorder %s32, 1
      %p180 = por %p178, %p179
      %p181 = scmp.ne.s32.totalorder %s170, %s171
      %p182 = scmp.eq.s32.totalorder %s32, 0
      %p183 = por %p181, %p182
      %p184 = scmp.ne.s32.totalorder %s170, %s171
      %p185 = scmp.eq.s32.totalorder %s33, 1
      %p186 = por %p184, %p185
      %p188 = scmp.ne.s32.totalorder %s171, %s187
      %p189 = scmp.eq.s32.totalorder %s33, 0
      %p190 = por %p188, %p189
      %p191 = scmp.le.s32.totalorder 1, %s27
      %p192 = scmp.lt.s32.totalorder %s27, 3
      %p193 = pnand %p191, %p192
      %p194 = pneg %p193
      // Predicated region
      $region9: #{tpu_custom_call.1} parent=5 // pred_check
        _
      $region10: #{tpu_custom_call.1} parent=5 // pred_check_branch
        %196 = sbr.rel (%p193) target = $region12
      $region11: #{tpu_custom_call.1} parent=5 // pred_region
        %s197 = ssub.s32 %s27, 1
      $region12: #{tpu_custom_call.1} parent=5 // pred_fallthru
        _
      %p198 = scmp.lt.s32.totalorder %s27, 2
      // Predicated region
      $region13: #{tpu_custom_call.1} parent=5 // pred_check
        %p199 = pneg %p198
      $region14: #{tpu_custom_call.1} parent=5 // pred_check_branch
        %201 = sbr.rel (%p199) target = $region16
      $region15: #{tpu_custom_call.1} parent=5 // pred_region
        // Predicated region
        $region17: #{tpu_custom_call.1} parent=15 // pred_check
          %p202 = pneg %p47
        $region18: #{tpu_custom_call.1} parent=15 // pred_check_branch
          %204 = sbr.rel (%p202) target = $region20
        $region19: #{tpu_custom_call.1} parent=15 // pred_region
          %s205 = sand.u32 %s37, 1
          %s206 = scalar_lea.sflag [#allocation3], %s205
          %s207 = sand.u32 %s37, 1
          %s208 = smul.addr %s207, 8
          %s209 = scalar_lea.vmem [#allocation2], %s208
          %211 = vsyncadd %s206, 0
          %s212 = smul.addr %s27, 8
          %s213 = scalar_lea.hbm %s0, %s212
          %s215 = sshll.u32 %s213, 4
          %s216 = int_to_ptr.hbm [resolvable:$true] %s215
          %s217 = sshll.u32 %s209, 4
          %s218 = int_to_ptr.vmem [resolvable:$true] %s217
          %220 = dma.hbm_to_vmem [thread:$0]  %s216, 128, %s218, %s206
        $region20: #{tpu_custom_call.1} parent=15 // pred_fallthru
          _
        // Predicated region
        $region21: #{tpu_custom_call.1} parent=15 // pred_check
          %p221 = pneg %p73
        $region22: #{tpu_custom_call.1} parent=15 // pred_check_branch
          %223 = sbr.rel (%p221) target = $region24
        $region23: #{tpu_custom_call.1} parent=15 // pred_region
          %s224 = sand.u32 %s27, 1
          %s225 = scalar_lea.sflag [#allocation6], %s224
          %s226 = sand.u32 %s63, 1
          %s227 = smul.addr %s226, 8
          %s228 = scalar_lea.vmem [#allocation5], %s227
          %230 = vsyncadd %s225, 0
          %s231 = smul.addr %s27, 8
          %s232 = scalar_lea.hbm %s1, %s231
          %s234 = sshll.u32 %s232, 4
          %s235 = int_to_ptr.hbm [resolvable:$true] %s234
          %s236 = sshll.u32 %s228, 4
          %s237 = int_to_ptr.vmem [resolvable:$true] %s236
          %239 = dma.hbm_to_vmem [thread:$0]  %s235, 128, %s237, %s225
        $region24: #{tpu_custom_call.1} parent=15 // pred_fallthru
          _
        // Predicated region
        $region25: #{tpu_custom_call.1} parent=15 // pred_check
          %p240 = pneg %p99
        $region26: #{tpu_custom_call.1} parent=15 // pred_check_branch
          %242 = sbr.rel (%p240) target = $region28
        $region27: #{tpu_custom_call.1} parent=15 // pred_region
          %s243 = sand.u32 %s27, 1
          %s244 = scalar_lea.sflag [#allocation6], %s243
          %s245 = sand.u32 %s89, 1
          %s246 = smul.addr %s245, 8
          %s247 = scalar_lea.vmem [#allocation7], %s246
          %249 = vsyncadd %s244, 0
          %s250 = smul.addr %s27, 8
          %s251 = scalar_lea.hbm %s2, %s250
          %s253 = sshll.u32 %s251, 4
          %s254 = int_to_ptr.hbm [resolvable:$true] %s253
          %s255 = sshll.u32 %s247, 4
          %s256 = int_to_ptr.vmem [resolvable:$true] %s255
          %258 = dma.hbm_to_vmem [thread:$0]  %s254, 128, %s256, %s244
        $region28: #{tpu_custom_call.1} parent=15 // pred_fallthru
          _
        // Predicated region
        $region29: #{tpu_custom_call.1} parent=15 // pred_check
          %p259 = pneg %p125
        $region30: #{tpu_custom_call.1} parent=15 // pred_check_branch
          %261 = sbr.rel (%p259) target = $region32
        $region31: #{tpu_custom_call.1} parent=15 // pred_region
          %s262 = sand.u32 %s115, 1
          %s263 = scalar_lea.sflag [#allocation9], %s262
          %s264 = sand.u32 %s115, 1
          %s265 = smul.addr %s264, 8
          %s266 = scalar_lea.vmem [#allocation8], %s265
          %268 = vsyncadd %s263, 0
          %s269 = smul.addr %s27, 8
          %s270 = scalar_lea.hbm %s3, %s269
          %s272 = sshll.u32 %s270, 4
          %s273 = int_to_ptr.hbm [resolvable:$true] %s272
          %s274 = sshll.u32 %s266, 4
          %s275 = int_to_ptr.vmem [resolvable:$true] %s274
          %277 = dma.hbm_to_vmem [thread:$0]  %s273, 128, %s275, %s263
        $region32: #{tpu_custom_call.1} parent=15 // pred_fallthru
          _
      $region16: #{tpu_custom_call.1} parent=5 // pred_fallthru
        _
      %p278 = scmp.le.s32.totalorder 1, %s27
      %p279 = scmp.lt.s32.totalorder %s27, 3
      %p280 = pnand %p278, %p279
      %p281 = pneg %p280
      // Predicated region
      $region33: #{tpu_custom_call.1} parent=5 // pred_check
        _
      $region34: #{tpu_custom_call.1} parent=5 // pred_check_branch
        %283 = sbr.rel (%p280) target = $region36
      $region35: #{tpu_custom_call.1} parent=5 // pred_region
        %s284 = ssub.s32 %s27, 1
        %s285 = sand.u32 %s40, 1
        %s286 = scalar_lea.sflag [#allocation3], %s285
        %s287 = sand.u32 %s40, 1
        %s288 = smul.addr %s287, 8
        %s289 = scalar_lea.vmem [#allocation2], %s288
        // Predicated region
        $region37: #{tpu_custom_call.1} parent=35 // pred_check
          %p290 = pneg %p53
        $region38: #{tpu_custom_call.1} parent=35 // pred_check_branch
          %292 = sbr.rel (%p290) target = $region40
        $region39: #{tpu_custom_call.1} parent=35 // pred_region
          %294 = dma.done %s286, 128
        $region40: #{tpu_custom_call.1} parent=35 // pred_fallthru
          _
        %s295 = sand.u32 %s32, 1
        %s296 = scalar_lea.sflag [#allocation6], %s295
        %s297 = sand.u32 %s66, 1
        %s298 = smul.addr %s297, 8
        %s299 = scalar_lea.vmem [#allocation5], %s298
        // Predicated region
        $region41: #{tpu_custom_call.1} parent=35 // pred_check
          %p300 = pneg %p79
        $region42: #{tpu_custom_call.1} parent=35 // pred_check_branch
          %302 = sbr.rel (%p300) target = $region44
        $region43: #{tpu_custom_call.1} parent=35 // pred_region
          %304 = dma.done %s296, 128
        $region44: #{tpu_custom_call.1} parent=35 // pred_fallthru
          _
        %s305 = sand.u32 %s32, 1
        %s306 = scalar_lea.sflag [#allocation6], %s305
        %s307 = sand.u32 %s92, 1
        %s308 = smul.addr %s307, 8
        %s309 = scalar_lea.vmem [#allocation7], %s308
        // Predicated region
        $region45: #{tpu_custom_call.1} parent=35 // pred_check
          %p310 = pneg %p105
        $region46: #{tpu_custom_call.1} parent=35 // pred_check_branch
          %312 = sbr.rel (%p310) target = $region48
        $region47: #{tpu_custom_call.1} parent=35 // pred_region
          %314 = dma.done %s306, 128
        $region48: #{tpu_custom_call.1} parent=35 // pred_fallthru
          _
        %s315 = sand.u32 %s118, 1
        %s316 = scalar_lea.sflag [#allocation9], %s315
        %s317 = sand.u32 %s118, 1
        %s318 = smul.addr %s317, 8
        %s319 = scalar_lea.vmem [#allocation8], %s318
        // Predicated region
        $region49: #{tpu_custom_call.1} parent=35 // pred_check
          %p320 = pneg %p131
        $region50: #{tpu_custom_call.1} parent=35 // pred_check_branch
          %322 = sbr.rel (%p320) target = $region52
        $region51: #{tpu_custom_call.1} parent=35 // pred_region
          %324 = dma.done %s316, 128
        $region52: #{tpu_custom_call.1} parent=35 // pred_fallthru
          _
        %s325 = sand.u32 %s40, 1
        %s326 = scalar_lea.sflag [#allocation3], %s325
        %s327 = sand.u32 %s40, 1
        %s328 = smul.addr %s327, 8
        %s329 = scalar_lea.vmem [#allocation2], %s328
        %p330 = pneg %p53
        %p331 = pneg %p50
        %s332 = sand.u32 %s32, 1
        %s333 = scalar_lea.sflag [#allocation6], %s332
        %s334 = sand.u32 %s66, 1
        %s335 = smul.addr %s334, 8
        %s336 = scalar_lea.vmem [#allocation5], %s335
        %p337 = pneg %p79
        %p338 = pneg %p76
        %s339 = sand.u32 %s32, 1
        %s340 = scalar_lea.sflag [#allocation6], %s339
        %s341 = sand.u32 %s92, 1
        %s342 = smul.addr %s341, 8
        %s343 = scalar_lea.vmem [#allocation7], %s342
        %p344 = pneg %p105
        %p345 = pneg %p102
        %s346 = sand.u32 %s118, 1
        %s347 = scalar_lea.sflag [#allocation9], %s346
        %s348 = sand.u32 %s118, 1
        %s349 = smul.addr %s348, 8
        %s350 = scalar_lea.vmem [#allocation8], %s349
        %p351 = pneg %p131
        %p352 = pneg %p128
        %p353 = pneg %p157
        %p354 = pneg %p154
        %s355 = sand.u32 %s144, 1
        %s356 = scalar_lea.sflag [#allocation4], %s355
        %s357 = sand.u32 %s144, 1
        %s358 = smul.addr %s357, 16
        %s359 = scalar_lea.vmem [#allocation10], %s358
        %p360 = pneg %p183
        %p361 = pneg %p180
        %s362 = sand.u32 %s170, 1
        %s363 = scalar_lea.sflag [#allocation12], %s362
        %s364 = sand.u32 %s170, 1
        %s365 = smul.addr %s364, 16
        %s366 = scalar_lea.vmem [#allocation11], %s365
        %v367 = vld [vmem:[%s289] sm:$0xff]
        %368 = vst [vmem:[%s359] sm:$0xff] %v367
        %v369 = vld [vmem:[%s299] sm:$0xff]
        %370 = vst [vmem:[%s359 + $0x8] sm:$0xff] %v369
        %v371 = vld [vmem:[%s309] sm:$0xff]
        %372 = vst [vmem:[%s366] sm:$0xff] %v371
        %v373 = vld [vmem:[%s319] sm:$0xff]
        %374 = vst [vmem:[%s366 + $0x8] sm:$0xff] %v373
        %s375 = sand.u32 %s144, 1
        %s376 = scalar_lea.sflag [#allocation4], %s375
        %s377 = sand.u32 %s144, 1
        %s378 = smul.addr %s377, 16
        %s379 = scalar_lea.vmem [#allocation10], %s378
        %s380 = sand.u32 %s170, 1
        %s381 = scalar_lea.sflag [#allocation12], %s380
        %s382 = sand.u32 %s170, 1
        %s383 = smul.addr %s382, 16
        %s384 = scalar_lea.vmem [#allocation11], %s383
        // Predicated region
        $region53: #{tpu_custom_call.1} parent=35 // pred_check
          %p385 = pneg %p154
        $region54: #{tpu_custom_call.1} parent=35 // pred_check_branch
          %387 = sbr.rel (%p385) target = $region56
        $region55: #{tpu_custom_call.1} parent=35 // pred_region
          %389 = vsyncadd %s376, 0
          %s390 = smul.addr %s32, 2
          %s391 = smul.addr %s390, 8
          %s392 = scalar_lea.hbm %s4, %s391
          %s394 = sshll.u32 %s379, 4
          %s395 = int_to_ptr.vmem [resolvable:$true] %s394
          %s396 = sshll.u32 %s392, 4
          %s397 = int_to_ptr.hbm [resolvable:$true] %s396
          %399 = dma.vmem_to_hbm [thread:$0]  %s395, 256, %s397, %s376
        $region56: #{tpu_custom_call.1} parent=35 // pred_fallthru
          _
        // Predicated region
        $region57: #{tpu_custom_call.1} parent=35 // pred_check
          %p400 = pneg %p180
        $region58: #{tpu_custom_call.1} parent=35 // pred_check_branch
          %402 = sbr.rel (%p400) target = $region60
        $region59: #{tpu_custom_call.1} parent=35 // pred_region
          %404 = vsyncadd %s381, 0
          %s405 = smul.addr %s32, 2
          %s406 = smul.addr %s405, 8
          %s407 = scalar_lea.hbm %s5, %s406
          %s409 = sshll.u32 %s384, 4
          %s410 = int_to_ptr.vmem [resolvable:$true] %s409
          %s411 = sshll.u32 %s407, 4
          %s412 = int_to_ptr.hbm [resolvable:$true] %s411
          %414 = dma.vmem_to_hbm [thread:$0]  %s410, 256, %s412, %s381
        $region60: #{tpu_custom_call.1} parent=35 // pred_fallthru
          _
      $region36: #{tpu_custom_call.1} parent=5 // pred_fallthru
        _
      %p415 = scmp.le.s32.totalorder 2, %s27
      // Predicated region
      $region61: #{tpu_custom_call.1} parent=5 // pred_check
        %p416 = pneg %p415
      $region62: #{tpu_custom_call.1} parent=5 // pred_check_branch
        %418 = sbr.rel (%p416) target = $region64
      $region63: #{tpu_custom_call.1} parent=5 // pred_region
        %s419 = ssub.s32 %s27, 2
        // Predicated region
        $region65: #{tpu_custom_call.1} parent=63 // pred_check
          %p420 = pneg %p160
        $region66: #{tpu_custom_call.1} parent=63 // pred_check_branch
          %422 = sbr.rel (%p420) target = $region68
        $region67: #{tpu_custom_call.1} parent=63 // pred_region
          %s423 = sand.u32 %s145, 1
          %s424 = scalar_lea.sflag [#allocation4], %s423
          %s425 = sand.u32 %s145, 1
          %s426 = smul.addr %s425, 16
          %s427 = scalar_lea.vmem [#allocation10], %s426
          %429 = dma.done %s424, 256
        $region68: #{tpu_custom_call.1} parent=63 // pred_fallthru
          _
        // Predicated region
        $region69: #{tpu_custom_call.1} parent=63 // pred_check
          %p430 = pneg %p186
        $region70: #{tpu_custom_call.1} parent=63 // pred_check_branch
          %432 = sbr.rel (%p430) target = $region72
        $region71: #{tpu_custom_call.1} parent=63 // pred_region
          %s433 = sand.u32 %s171, 1
          %s434 = scalar_lea.sflag [#allocation12], %s433
          %s435 = sand.u32 %s171, 1
          %s436 = smul.addr %s435, 16
          %s437 = scalar_lea.vmem [#allocation11], %s436
          %439 = dma.done %s434, 256
        $region72: #{tpu_custom_call.1} parent=63 // pred_fallthru
          _
      $region64: #{tpu_custom_call.1} parent=5 // pred_fallthru
        _
    $region6: #{tpu_custom_call.1} parent=1 // loop_footer
      %s31 = sadd.s32 1, %s27
    $region7: #{tpu_custom_call.1} parent=1 // loop_footer_branch
      %26 = sbr.rel target = $region3
    $region8: #{tpu_custom_call.1} parent=1 // loop_exit
      _
    %440 = vsyncpa [#allocation3], 1
    %s441 = scalar_lea.sflag [#allocation3], 1
    %442 = vsyncpa %s441, 1
    %443 = vsyncpa [#allocation6], 1
    %s444 = scalar_lea.sflag [#allocation6], 1
    %445 = vsyncpa %s444, 1
    %446 = vsyncpa [#allocation9], 1
    %s447 = scalar_lea.sflag [#allocation9], 1
    %448 = vsyncpa %s447, 1
    %449 = vsyncpa [#allocation4], 1
    %s450 = scalar_lea.sflag [#allocation4], 1
    %451 = vsyncpa %s450, 1
    %452 = vsyncpa [#allocation12], 1
    %s453 = scalar_lea.sflag [#allocation12], 1
    %454 = vsyncpa %s453, 1

</llo_original>
